<compile_context>
chip_gen: v7x
topology: tpu7x:2x2x1
jax: 0.10.0
libtpu: 0.0.40
codegen_flags: <defaults>
</compile_context>

<pallas_src>
import math

import jax
import jax.numpy as jnp
from jax.experimental import pallas as pl
from jax.experimental.pallas import tpu as pltpu


def _round_up(x, m):
    return ((x + m - 1) // m) * m


def _pad_gate_cols(w, H, Hp):
    # w: (..., 4*H) with PyTorch gate layout [i|f|g|o]; pad each gate block to Hp cols.
    if H == Hp:
        return w
    lead = w.shape[:-1]
    w4 = w.reshape(*lead, 4, H)
    w4 = jnp.pad(w4, [(0, 0)] * len(lead) + [(0, 0), (0, Hp - H)])
    return w4.reshape(*lead, 4 * Hp)


def _pad_rows(w, H, Hp):
    if H == Hp:
        return w
    return jnp.pad(w, [(0, Hp - H), (0, 0)])


def _choose_block_n(N, T, Hp, num_layers, budget_bytes=40 * 1024 * 1024):
    """Pick a row tile (multiple of 8) whose double-buffered VMEM footprint fits."""
    f32 = 4
    need = _round_up(max(N, 8), 8)
    w_bytes = (Hp + max(num_layers - 1, 0) * 2 * Hp) * 4 * Hp * f32
    for tn in (512, 256, 128, 64, 32, 16, 8):
        if tn > need and tn != 8:
            continue
        x_blk = 2 * T * tn * 4 * Hp * f32          # double-buffered layer-0 proj tile
        out_blk = 2 * tn * Hp * f32
        scr = 2 * num_layers * tn * Hp * f32       # h + c scratch
        if x_blk + out_blk + scr + w_bytes <= budget_bytes:
            return min(tn, need)
    return 8


def make_lstm_kernel(num_layers, seg_length, Hp):
    """Kernel args: xp_ref, whh0_ref, [wcat_l, b_l for l=1..L-1], h_out_ref, h_scr, c_scr."""

    def kernel(xp_ref, whh0_ref, *args):
        n_extra = 2 * (num_layers - 1)
        layer_refs = args[:n_extra]
        h_out_ref = args[n_extra]
        h_scr = args[n_extra + 1]   # (num_layers, TN, Hp)
        c_scr = args[n_extra + 2]   # (num_layers, TN, Hp)

        # Fresh zero state for this row tile.
        h_scr[...] = jnp.zeros_like(h_scr)
        c_scr[...] = jnp.zeros_like(c_scr)

        # Hoist loop-invariant weight / bias loads out of the time loop.
        whh0 = whh0_ref[...]                                    # (Hp, 4Hp)
        wcats = [layer_refs[2 * i][...] for i in range(num_layers - 1)]   # (2Hp, 4Hp)
        biases = [layer_refs[2 * i + 1][...] for i in range(num_layers - 1)]  # (1, 4Hp)

        def cell(l, gates):
            # 128-lane aligned gate slices (Hp is a multiple of 128).
            i_g = jax.nn.sigmoid(gates[:, 0:Hp])
            f_g = jax.nn.sigmoid(gates[:, Hp:2 * Hp])
            g_g = jnp.tanh(gates[:, 2 * Hp:3 * Hp])
            o_g = jax.nn.sigmoid(gates[:, 3 * Hp:4 * Hp])
            c_new = f_g * c_scr[l] + i_g * g_g
            h_new = o_g * jnp.tanh(c_new)
            h_scr[l] = h_new
            c_scr[l] = c_new
            return h_new

        @pl.loop(0, seg_length)
        def _(t):
            # Layer 0: input projection (incl. bias) precomputed -> single MXU matmul.
            gates0 = xp_ref[t] + jnp.dot(
                h_scr[0], whh0, preferred_element_type=jnp.float32)
            inp = cell(0, gates0)
            # Stacked layers: one fused matmul per layer per step.
            for l in range(1, num_layers):
                cat = jnp.concatenate([inp, h_scr[l]], axis=1)   # (TN, 2Hp), aligned
                gates = jnp.dot(cat, wcats[l - 1],
                                preferred_element_type=jnp.float32) + biases[l - 1]
                inp = cell(l, gates)

        h_out_ref[...] = h_scr[num_layers - 1]   # final hidden of last layer

    return kernel


def seg_rnn_forward(x, params, seg_length, hidden_dim, num_layers):
    B, S, D = x.shape
    T = seg_length
    H = hidden_dim
    nseg = S // T
    Hp = _round_up(max(H, 1), 128)

    x = x[:, : nseg * T, :]
    N = B * nseg
    x_tm = jnp.transpose(x.reshape(N, T, D), (1, 0, 2))          # time-major (T, N, D)

    block_n = _choose_block_n(N, T, Hp, num_layers)
    N_pad = _round_up(N, block_n)
    if N_pad != N:
        x_tm = jnp.pad(x_tm, ((0, 0), (0, N_pad - N), (0, 0)))

    # --- one-time weight packing / per-gate padding (XLA) ---------------------------
    wih0 = _pad_gate_cols(params["wih0_t"], H, Hp)                        # (D, 4Hp)
    b0 = _pad_gate_cols(params["b0"], H, Hp)                              # (1, 4Hp)
    whh0 = _pad_rows(_pad_gate_cols(params["whh0_t"], H, Hp), H, Hp)      # (Hp, 4Hp)

    # Layer-0 input projection for all (t, n) at once: one big matmul instead of T
    # tiny-K matmuls inside the recurrence.
    x_proj0 = (x_tm.reshape(T * N_pad, D) @ wih0 + b0).astype(jnp.float32)
    x_proj0 = x_proj0.reshape(T, N_pad, 4 * Hp)

    lstm_inputs = [x_proj0, whh0]
    in_specs = [
        pl.BlockSpec((T, block_n, 4 * Hp), lambda i: (0, i, 0)),
        pl.BlockSpec((Hp, 4 * Hp), lambda i: (0, 0)),
    ]
    for l in range(1, num_layers):
        wih = _pad_rows(_pad_gate_cols(params[f"wih{l}_t"], H, Hp), H, Hp)
        whh = _pad_rows(_pad_gate_cols(params[f"whh{l}_t"], H, Hp), H, Hp)
        wcat = jnp.concatenate([wih, whh], axis=0)                        # (2Hp, 4Hp)
        b = _pad_gate_cols(params[f"b{l}"], H, Hp)                        # (1, 4Hp)
        lstm_inputs += [wcat, b]
        in_specs += [
            pl.BlockSpec((2 * Hp, 4 * Hp), lambda i: (0, 0)),
            pl.BlockSpec((1, 4 * Hp), lambda i: (0, 0)),
        ]

    h_final = pl.pallas_call(
        make_lstm_kernel(num_layers, T, Hp),
        out_shape=jax.ShapeDtypeStruct((N_pad, Hp), jnp.float32),
        grid=(N_pad // block_n,),
        in_specs=in_specs,
        out_specs=pl.BlockSpec((block_n, Hp), lambda i: (i, 0)),
        scratch_shapes=[
            pltpu.VMEM((num_layers, block_n, Hp), jnp.float32),   # hidden state
            pltpu.VMEM((num_layers, block_n, Hp), jnp.float32),   # cell state
        ],
        compiler_params=pltpu.CompilerParams(
            dimension_semantics=("parallel",),
            vmem_limit_bytes=64 * 1024 * 1024,
        ),
    )(*lstm_inputs)

    # Head: mean over segments + Linear(H, O). Tiny (KFLOPs) -> plain XLA; a separate
    # pallas_call would be pure launch/DMA overhead with a lane-sparse output.
    h_real = h_final[:N, :H].reshape(B, nseg, H)
    hm = jnp.mean(h_real, axis=1)
    return hm @ params["fc_w_t"] + params["fc_b"]


def reference_forward(x, params, seg_length, hidden_dim, num_layers):
    # Pure-JAX reference matching the PyTorch forward semantics.
    B, S, D = x.shape
    nseg = S // seg_length
    H = hidden_dim
    xs = x[:, : nseg * seg_length, :].reshape(B * nseg, seg_length, D)
    N = B * nseg
    h = [jnp.zeros((N, H), jnp.float32) for _ in range(num_layers)]
    c = [jnp.zeros((N, H), jnp.float32) for _ in range(num_layers)]
    for t in range(seg_length):
        inp = xs[:, t, :]
        for l in range(num_layers):
            gates = (inp @ params[f"wih{l}_t"] + h[l] @ params[f"whh{l}_t"]
                     + params[f"b{l}"])
            i = jax.nn.sigmoid(gates[:, :H])
            f = jax.nn.sigmoid(gates[:, H:2 * H])
            g = jnp.tanh(gates[:, 2 * H:3 * H])
            o = jax.nn.sigmoid(gates[:, 3 * H:])
            c[l] = f * c[l] + i * g
            h[l] = o * jnp.tanh(c[l])
            inp = h[l]
    hm = h[-1].reshape(B, nseg, H).mean(axis=1)
    return hm @ params["fc_w_t"] + params["fc_b"]


if __name__ == "__main__":
    # Small shapes consistent with the module's forward.
    B, S, D = 2, 16, 4            # batch, seq_length, input_dim
    H, O = 32, 3                  # hidden_dim, output_dim
    L, SEG = 2, 8                 # num_layers, seg_length

    key = jax.random.PRNGKey(0)
    keys = jax.random.split(key, 3 * L + 3)
    k = 1.0 / math.sqrt(H)

    # Deterministic synthetic parameters (PyTorch-style uniform(-1/sqrt(H), 1/sqrt(H))).
    # Weights are stored pre-transposed; b{l} represents b_ih + b_hh combined.
    params = {}
    idx = 0
    for l in range(L):
        d_in = D if l == 0 else H
        params[f"wih{l}_t"] = jax.random.uniform(
            keys[idx], (d_in, 4 * H), jnp.float32, -k, k); idx += 1
        params[f"whh{l}_t"] = jax.random.uniform(
            keys[idx], (H, 4 * H), jnp.float32, -k, k); idx += 1
        params[f"b{l}"] = jax.random.uniform(
            keys[idx], (1, 4 * H), jnp.float32, -2 * k, 2 * k); idx += 1
    params["fc_w_t"] = jax.random.uniform(keys[idx], (H, O), jnp.float32, -k, k); idx += 1
    params["fc_b"] = jax.random.uniform(keys[idx], (1, O), jnp.float32, -k, k); idx += 1

    x = jax.random.normal(keys[idx], (B, S, D), jnp.float32)

    out = seg_rnn_forward(x, params, SEG, H, L)
    out = jax.block_until_ready(out)
    assert out.shape == (B, O), out.shape

    ref = reference_forward(x, params, SEG, H, L)
    err = float(jnp.max(jnp.abs(out - ref)))
    assert err < 1e-2, f"max abs err {err}"

    print("KERNEL_OK")
</pallas_src>

<mosaic_0001>
module attributes {stable_mosaic.version = 11 : i64} {
  func.func @kernel(%arg0: i32, %arg1: memref<8x8x512xf32, #tpu.memory_space<vmem>>, %arg2: memref<128x512xf32, #tpu.memory_space<vmem>>, %arg3: memref<256x512xf32, #tpu.memory_space<vmem>>, %arg4: memref<1x512xf32, #tpu.memory_space<vmem>>, %arg5: memref<8x128xf32, #tpu.memory_space<vmem>>, %arg6: memref<2x8x128xf32, #tpu.memory_space<vmem>>, %arg7: memref<2x8x128xf32, #tpu.memory_space<vmem>>) attributes {dimension_semantics = [#tpu.dimension_semantics<parallel>], iteration_bounds = array<i64: 1>, scalar_prefetch = 0 : i64, scratch_operands = 2 : i64, tpu.core_type = #tpu.core_type<tc>, window_params = [{transform_indices = @transform_0, window_bounds = array<i64: 8, 8, 512>}, {pipeline_mode = #tpu.pipeline_mode<synchronous>, transform_indices = @transform_1, window_bounds = array<i64: 128, 512>}, {pipeline_mode = #tpu.pipeline_mode<synchronous>, transform_indices = @transform_2, window_bounds = array<i64: 256, 512>}, {pipeline_mode = #tpu.pipeline_mode<synchronous>, transform_indices = @transform_3, window_bounds = array<i64: 1, 512>}, {transform_indices = @transform_4, window_bounds = array<i64: 8, 128>}]} {
    %cst = arith.constant 0.000000e+00 : f32
    %0 = vector.broadcast %cst : f32 to vector<2x8x128xf32>
    %c0 = arith.constant 0 : index
    %c0_0 = arith.constant 0 : index
    %c0_1 = arith.constant 0 : index
    %1 = vector.load %arg6[%c0, %c0_0, %c0_1] : memref<2x8x128xf32, #tpu.memory_space<vmem>>, vector<2x8x128xf32>
    tpu.vector_store %arg6[%c0, %c0_0, %c0_1], %0 {strides = array<i32>} : memref<2x8x128xf32, #tpu.memory_space<vmem>>, vector<2x8x128xf32>,
    %cst_2 = arith.constant 0.000000e+00 : f32
    %2 = vector.broadcast %cst_2 : f32 to vector<2x8x128xf32>
    %c0_3 = arith.constant 0 : index
    %c0_4 = arith.constant 0 : index
    %c0_5 = arith.constant 0 : index
    %3 = vector.load %arg7[%c0_3, %c0_4, %c0_5] : memref<2x8x128xf32, #tpu.memory_space<vmem>>, vector<2x8x128xf32>
    tpu.vector_store %arg7[%c0_3, %c0_4, %c0_5], %2 {strides = array<i32>} : memref<2x8x128xf32, #tpu.memory_space<vmem>>, vector<2x8x128xf32>,
    %c0_6 = arith.constant 0 : index
    %c0_7 = arith.constant 0 : index
    %4 = vector.load %arg2[%c0_6, %c0_7] : memref<128x512xf32, #tpu.memory_space<vmem>>, vector<128x512xf32>
    %c0_8 = arith.constant 0 : index
    %c0_9 = arith.constant 0 : index
    %5 = vector.load %arg3[%c0_8, %c0_9] : memref<256x512xf32, #tpu.memory_space<vmem>>, vector<256x512xf32>
    %c0_10 = arith.constant 0 : index
    %c0_11 = arith.constant 0 : index
    %6 = vector.load %arg4[%c0_10, %c0_11] : memref<1x512xf32, #tpu.memory_space<vmem>>, vector<1x512xf32>
    %c0_i32 = arith.constant 0 : i32
    %c8_i32 = arith.constant 8 : i32
    %7 = arith.addi %c0_i32, %c8_i32 : i32
    %c1_i32 = arith.constant 1 : i32
    scf.for %arg8 = %c0_i32 to %7 step %c1_i32  : i32 {
      %c1_i32_17 = arith.constant 1 : i32
      %11 = arith.muli %arg8, %c1_i32_17 : i32
      %c0_i32_18 = arith.constant 0 : i32
      %12 = arith.addi %c0_i32_18, %11 : i32
      %13 = arith.index_cast %12 : i32 to index
      %c0_19 = arith.constant 0 : index
      %c0_20 = arith.constant 0 : index
      %14 = vector.load %arg1[%13, %c0_19, %c0_20] : memref<8x8x512xf32, #tpu.memory_space<vmem>>, vector<1x8x512xf32>
      %15 = vector.shape_cast %14 : vector<1x8x512xf32> to vector<8x512xf32>
      %c0_21 = arith.constant 0 : index
      %c0_22 = arith.constant 0 : index
      %c0_23 = arith.constant 0 : index
      %16 = vector.load %arg6[%c0_21, %c0_22, %c0_23] : memref<2x8x128xf32, #tpu.memory_space<vmem>>, vector<1x8x128xf32>
      %17 = vector.shape_cast %16 : vector<1x8x128xf32> to vector<8x128xf32>
      %cst_24 = arith.constant dense<0.000000e+00> : vector<8x512xf32>
      %18 = tpu.matmul %17, %4, %cst_24 {dimension_numbers = #tpu.dot_dimension_numbers<[1], [0], [0], [1], [0, 0, 1, 1], [], []>} : vector<8x128xf32>, vector<128x512xf32>, vector<8x512xf32> -> vector<8x512xf32>
      %19 = arith.addf %15, %18 : vector<8x512xf32>
      %20 = vector.extract_strided_slice %19 {offsets = [0, 0], sizes = [8, 128], strides = [1, 1]} : vector<8x512xf32> to vector<8x128xf32>
      %21 = arith.negf %20 : vector<8x128xf32>
      %22 = math.exp %21 : vector<8x128xf32>
      %cst_25 = arith.constant 1.000000e+00 : f32
      %23 = vector.broadcast %cst_25 : f32 to vector<8x128xf32>
      %24 = arith.addf %23, %22 : vector<8x128xf32>
      %25 = arith.divf %23, %24 : vector<8x128xf32>
      %26 = vector.extract_strided_slice %19 {offsets = [0, 128], sizes = [8, 128], strides = [1, 1]} : vector<8x512xf32> to vector<8x128xf32>
      %27 = arith.negf %26 : vector<8x128xf32>
      %28 = math.exp %27 : vector<8x128xf32>
      %cst_26 = arith.constant 1.000000e+00 : f32
      %29 = vector.broadcast %cst_26 : f32 to vector<8x128xf32>
      %30 = arith.addf %29, %28 : vector<8x128xf32>
      %31 = arith.divf %29, %30 : vector<8x128xf32>
      %32 = vector.extract_strided_slice %19 {offsets = [0, 256], sizes = [8, 128], strides = [1, 1]} : vector<8x512xf32> to vector<8x128xf32>
      %33 = math.tanh %32 : vector<8x128xf32>
      %34 = vector.extract_strided_slice %19 {offsets = [0, 384], sizes = [8, 128], strides = [1, 1]} : vector<8x512xf32> to vector<8x128xf32>
      %35 = arith.negf %34 : vector<8x128xf32>
      %36 = math.exp %35 : vector<8x128xf32>
      %cst_27 = arith.constant 1.000000e+00 : f32
      %37 = vector.broadcast %cst_27 : f32 to vector<8x128xf32>
      %38 = arith.addf %37, %36 : vector<8x128xf32>
      %39 = arith.divf %37, %38 : vector<8x128xf32>
      %c0_28 = arith.constant 0 : index
      %c0_29 = arith.constant 0 : index
      %c0_30 = arith.constant 0 : index
      %40 = vector.load %arg7[%c0_28, %c0_29, %c0_30] : memref<2x8x128xf32, #tpu.memory_space<vmem>>, vector<1x8x128xf32>
      %41 = vector.shape_cast %40 : vector<1x8x128xf32> to vector<8x128xf32>
      %42 = arith.mulf %31, %41 : vector<8x128xf32>
      %43 = arith.mulf %25, %33 : vector<8x128xf32>
      %44 = arith.addf %42, %43 : vector<8x128xf32>
      %45 = math.tanh %44 : vector<8x128xf32>
      %46 = arith.mulf %39, %45 : vector<8x128xf32>
      %c0_31 = arith.constant 0 : index
      %c0_32 = arith.constant 0 : index
      %c0_33 = arith.constant 0 : index
      %47 = vector.load %arg6[%c0_31, %c0_32, %c0_33] : memref<2x8x128xf32, #tpu.memory_space<vmem>>, vector<1x8x128xf32>
      %48 = vector.shape_cast %47 : vector<1x8x128xf32> to vector<8x128xf32>
      %49 = vector.shape_cast %46 : vector<8x128xf32> to vector<1x8x128xf32>
      tpu.vector_store %arg6[%c0_31, %c0_32, %c0_33], %49 {strides = array<i32>} : memref<2x8x128xf32, #tpu.memory_space<vmem>>, vector<1x8x128xf32>,
      %c0_34 = arith.constant 0 : index
      %c0_35 = arith.constant 0 : index
      %c0_36 = arith.constant 0 : index
      %50 = vector.load %arg7[%c0_34, %c0_35, %c0_36] : memref<2x8x128xf32, #tpu.memory_space<vmem>>, vector<1x8x128xf32>
      %51 = vector.shape_cast %50 : vector<1x8x128xf32> to vector<8x128xf32>
      %52 = vector.shape_cast %44 : vector<8x128xf32> to vector<1x8x128xf32>
      tpu.vector_store %arg7[%c0_34, %c0_35, %c0_36], %52 {strides = array<i32>} : memref<2x8x128xf32, #tpu.memory_space<vmem>>, vector<1x8x128xf32>,
      %c1_37 = arith.constant 1 : index
      %c0_38 = arith.constant 0 : index
      %c0_39 = arith.constant 0 : index
      %53 = vector.load %arg6[%c1_37, %c0_38, %c0_39] : memref<2x8x128xf32, #tpu.memory_space<vmem>>, vector<1x8x128xf32>
      %54 = vector.shape_cast %53 : vector<1x8x128xf32> to vector<8x128xf32>
      %55 = tpu.concatenate %46, %54 in 1 : vector<8x128xf32>, vector<8x128xf32> -> vector<8x256xf32>
      %cst_40 = arith.constant dense<0.000000e+00> : vector<8x512xf32>
      %56 = tpu.matmul %55, %5, %cst_40 {dimension_numbers = #tpu.dot_dimension_numbers<[1], [0], [0], [1], [0, 0, 1, 1], [], []>} : vector<8x256xf32>, vector<256x512xf32>, vector<8x512xf32> -> vector<8x512xf32>
      %57 = vector.broadcast %6 : vector<1x512xf32> to vector<8x512xf32>
      %58 = arith.addf %56, %57 : vector<8x512xf32>
      %59 = vector.extract_strided_slice %58 {offsets = [0, 0], sizes = [8, 128], strides = [1, 1]} : vector<8x512xf32> to vector<8x128xf32>
      %60 = arith.negf %59 : vector<8x128xf32>
      %61 = math.exp %60 : vector<8x128xf32>
      %cst_41 = arith.constant 1.000000e+00 : f32
      %62 = vector.broadcast %cst_41 : f32 to vector<8x128xf32>
      %63 = arith.addf %62, %61 : vector<8x128xf32>
      %64 = arith.divf %62, %63 : vector<8x128xf32>
      %65 = vector.extract_strided_slice %58 {offsets = [0, 128], sizes = [8, 128], strides = [1, 1]} : vector<8x512xf32> to vector<8x128xf32>
      %66 = arith.negf %65 : vector<8x128xf32>
      %67 = math.exp %66 : vector<8x128xf32>
      %cst_42 = arith.constant 1.000000e+00 : f32
      %68 = vector.broadcast %cst_42 : f32 to vector<8x128xf32>
      %69 = arith.addf %68, %67 : vector<8x128xf32>
      %70 = arith.divf %68, %69 : vector<8x128xf32>
      %71 = vector.extract_strided_slice %58 {offsets = [0, 256], sizes = [8, 128], strides = [1, 1]} : vector<8x512xf32> to vector<8x128xf32>
      %72 = math.tanh %71 : vector<8x128xf32>
      %73 = vector.extract_strided_slice %58 {offsets = [0, 384], sizes = [8, 128], strides = [1, 1]} : vector<8x512xf32> to vector<8x128xf32>
      %74 = arith.negf %73 : vector<8x128xf32>
      %75 = math.exp %74 : vector<8x128xf32>
      %cst_43 = arith.constant 1.000000e+00 : f32
      %76 = vector.broadcast %cst_43 : f32 to vector<8x128xf32>
      %77 = arith.addf %76, %75 : vector<8x128xf32>
      %78 = arith.divf %76, %77 : vector<8x128xf32>
      %c1_44 = arith.constant 1 : index
      %c0_45 = arith.constant 0 : index
      %c0_46 = arith.constant 0 : index
      %79 = vector.load %arg7[%c1_44, %c0_45, %c0_46] : memref<2x8x128xf32, #tpu.memory_space<vmem>>, vector<1x8x128xf32>
      %80 = vector.shape_cast %79 : vector<1x8x128xf32> to vector<8x128xf32>
      %81 = arith.mulf %70, %80 : vector<8x128xf32>
      %82 = arith.mulf %64, %72 : vector<8x128xf32>
      %83 = arith.addf %81, %82 : vector<8x128xf32>
      %84 = math.tanh %83 : vector<8x128xf32>
      %85 = arith.mulf %78, %84 : vector<8x128xf32>
      %c1_47 = arith.constant 1 : index
      %c0_48 = arith.constant 0 : index
      %c0_49 = arith.constant 0 : index
      %86 = vector.load %arg6[%c1_47, %c0_48, %c0_49] : memref<2x8x128xf32, #tpu.memory_space<vmem>>, vector<1x8x128xf32>
      %87 = vector.shape_cast %86 : vector<1x8x128xf32> to vector<8x128xf32>
      %88 = vector.shape_cast %85 : vector<8x128xf32> to vector<1x8x128xf32>
      tpu.vector_store %arg6[%c1_47, %c0_48, %c0_49], %88 {strides = array<i32>} : memref<2x8x128xf32, #tpu.memory_space<vmem>>, vector<1x8x128xf32>,
      %c1_50 = arith.constant 1 : index
      %c0_51 = arith.constant 0 : index
      %c0_52 = arith.constant 0 : index
      %89 = vector.load %arg7[%c1_50, %c0_51, %c0_52] : memref<2x8x128xf32, #tpu.memory_space<vmem>>, vector<1x8x128xf32>
      %90 = vector.shape_cast %89 : vector<1x8x128xf32> to vector<8x128xf32>
      %91 = vector.shape_cast %83 : vector<8x128xf32> to vector<1x8x128xf32>
      tpu.vector_store %arg7[%c1_50, %c0_51, %c0_52], %91 {strides = array<i32>} : memref<2x8x128xf32, #tpu.memory_space<vmem>>, vector<1x8x128xf32>,
    }
    %c8_i32_12 = arith.constant 8 : i32
    %c1 = arith.constant 1 : index
    %c0_13 = arith.constant 0 : index
    %c0_14 = arith.constant 0 : index
    %8 = vector.load %arg6[%c1, %c0_13, %c0_14] : memref<2x8x128xf32, #tpu.memory_space<vmem>>, vector<1x8x128xf32>
    %9 = vector.shape_cast %8 : vector<1x8x128xf32> to vector<8x128xf32>
    %c0_15 = arith.constant 0 : index
    %c0_16 = arith.constant 0 : index
    %10 = vector.load %arg5[%c0_15, %c0_16] : memref<8x128xf32, #tpu.memory_space<vmem>>, vector<8x128xf32>
    tpu.vector_store %arg5[%c0_15, %c0_16], %9 {strides = array<i32>} : memref<8x128xf32, #tpu.memory_space<vmem>>, vector<8x128xf32>,
    return
  }
  func.func @transform_0(%arg0: i32) -> (i32, i32, i32) {
    %c0_i32 = arith.constant 0 : i32
    %c0_i32_0 = arith.constant 0 : i32
    %c0_i32_1 = arith.constant 0 : i32
    return %c0_i32, %arg0, %c0_i32_0 : i32, i32, i32
  }
  func.func @transform_1(%arg0: i32) -> (i32, i32) {
    %c0_i32 = arith.constant 0 : i32
    %c0_i32_0 = arith.constant 0 : i32
    %c0_i32_1 = arith.constant 0 : i32
    return %c0_i32, %c0_i32_0 : i32, i32
  }
  func.func @transform_2(%arg0: i32) -> (i32, i32) {
    %c0_i32 = arith.constant 0 : i32
    %c0_i32_0 = arith.constant 0 : i32
    %c0_i32_1 = arith.constant 0 : i32
    return %c0_i32, %c0_i32_0 : i32, i32
  }
  func.func @transform_3(%arg0: i32) -> (i32, i32) {
    %c0_i32 = arith.constant 0 : i32
    %c0_i32_0 = arith.constant 0 : i32
    %c0_i32_1 = arith.constant 0 : i32
    return %c0_i32, %c0_i32_0 : i32, i32
  }
  func.func @transform_4(%arg0: i32) -> (i32, i32) {
    %c0_i32 = arith.constant 0 : i32
    %c0_i32_0 = arith.constant 0 : i32
    return %arg0, %c0_i32 : i32, i32
  }
}

</mosaic_0001>

<llo_original>
// kernel: tpu_custom_call.1
$region0: #{tpu_custom_call.1}
  #allocation0 [shape = 'u32[]', space=smem, size = 0x4, offset = 0x4, fixed_abs, tag = 'smem constant byte address 0x4 - core index']
  #allocation1 [shape = 'u32[144,128]{1,0:T(1,128)}', space=vmem, size = 0x12000, scoped, tag = 'internal scratch']
  #allocation2 [shape = 'f32[2,8,128]{2,1,0:T(8,128)}', space=vmem, size = 0x2000, scoped, tag = 'scratch operand']
  #allocation3 [shape = 'f32[2,8,128]{2,1,0:T(8,128)}', space=vmem, size = 0x2000, scoped, tag = 'scratch operand']
  %s0 = inlined_call_operand.hbm [shape: f32[8,8,512], index: 0, kind: input, shape index: {}]
  %s1 = inlined_call_operand.hbm [shape: f32[128,512], index: 1, kind: input, shape index: {}]
  %s2 = inlined_call_operand.hbm [shape: f32[256,512], index: 2, kind: input, shape index: {}]
  %s3 = inlined_call_operand.hbm [shape: f32[1,512], index: 3, kind: input, shape index: {}]
  %s4 = inlined_call_operand.hbm [shape: f32[8,128], index: 4, kind: output, shape index: {}]
  %s5 = sld [smem:[#allocation0]]
  $region49: #{tpu_custom_call.1} parent=0
    _
  %s7 = ssub.s32 1, %s5
  %s8 = scalar_select 0, %s7, %s5
  $region1: #{tpu_custom_call.1} parent=0
    #allocation4 [shape = 'u8[131072]{0}', space=vmem, size = 0x20000, scoped, tag = 'input window, operand 0, single buffered']
    #allocation5 [shape = 's32[1]{0}', space=sflag, size = 0x4, scoped, tag = 'scoped memory for tpu_custom_call.1']
    #allocation6 [shape = 's32[1]{0}', space=sflag, size = 0x4, scoped, tag = 'scoped memory for tpu_custom_call.1']
    #allocation7 [shape = 'u8[262144]{0}', space=vmem, size = 0x40000, scoped, tag = 'input window, operand 1, single buffered']
    #allocation8 [shape = 's32[1]{0}', space=sflag, size = 0x4, scoped, tag = 'scoped memory for tpu_custom_call.1']
    #allocation9 [shape = 'u8[524288]{0}', space=vmem, size = 0x80000, scoped, tag = 'input window, operand 2, single buffered']
    #allocation10 [shape = 'u8[2048]{0}', space=vmem, size = 0x800, scoped, tag = 'input window, operand 3, single buffered']
    #allocation11 [shape = 's32[1]{0}', space=sflag, size = 0x4, scoped, tag = 'scoped memory for tpu_custom_call.1']
    #allocation12 [shape = 'u8[4096]{0}', space=vmem, size = 0x1000, scoped, tag = 'output window, operand 0, single buffered']
    %9 = vsyncpa [#allocation5], 0
    %10 = vsyncpa [#allocation8], 0
    %11 = vsyncpa [#allocation11], 0
    %12 = vsyncpa [#allocation6], 0
    // Predicated region
    $region2: #{tpu_custom_call.1} parent=1 // pred_check
      _
    $region3: #{tpu_custom_call.1} parent=1 // pred_check_branch
      %14 = sbr.rel (0) target = $region5
    $region4: #{tpu_custom_call.1} parent=1 // pred_region
      %s16 = ssub.s32 4096, 4096
      %17 = vsyncadd [#allocation5], %s16
      %s18 = sshll.u32 [#allocation4], 4
      %s19 = int_to_ptr.vmem [resolvable:$true] %s18
      %24 = dma.hbm_to_vmem [thread:$0]  %s0, 4096, %s19, [#allocation5], 512, 512, 32
    $region5: #{tpu_custom_call.1} parent=1 // pred_fallthru
      _
    // Predicated region
    $region6: #{tpu_custom_call.1} parent=1 // pred_check
      _
    $region7: #{tpu_custom_call.1} parent=1 // pred_check_branch
      %26 = sbr.rel (0) target = $region9
    $region8: #{tpu_custom_call.1} parent=1 // pred_region
      %s28 = ssub.s32 8192, 8192
      %29 = vsyncadd [#allocation8], %s28
      %s30 = sshll.u32 [#allocation7], 4
      %s31 = int_to_ptr.vmem [resolvable:$true] %s30
      %36 = dma.hbm_to_vmem [thread:$0]  %s1, 8192, %s31, [#allocation8], 512, 512, 32
    $region9: #{tpu_custom_call.1} parent=1 // pred_fallthru
      _
    // Predicated region
    $region10: #{tpu_custom_call.1} parent=1 // pred_check
      _
    $region11: #{tpu_custom_call.1} parent=1 // pred_check_branch
      %38 = sbr.rel (0) target = $region13
    $region12: #{tpu_custom_call.1} parent=1 // pred_region
      %s40 = ssub.s32 16384, 16384
      %41 = vsyncadd [#allocation8], %s40
      %s42 = sshll.u32 [#allocation9], 4
      %s43 = int_to_ptr.vmem [resolvable:$true] %s42
      %48 = dma.hbm_to_vmem [thread:$0]  %s2, 16384, %s43, [#allocation8], 512, 512, 32
    $region13: #{tpu_custom_call.1} parent=1 // pred_fallthru
      _
    // Predicated region
    $region14: #{tpu_custom_call.1} parent=1 // pred_check
      _
    $region15: #{tpu_custom_call.1} parent=1 // pred_check_branch
      %50 = sbr.rel (0) target = $region17
    $region16: #{tpu_custom_call.1} parent=1 // pred_region
      %s52 = ssub.s32 64, 64
      %53 = vsyncadd [#allocation11], %s52
      %s55 = sshll.u32 [#allocation10], 4
      %s56 = int_to_ptr.vmem [resolvable:$true] %s55
      %58 = dma.hbm_to_vmem [thread:$0]  %s3, 64, %s56, [#allocation11]
    $region17: #{tpu_custom_call.1} parent=1 // pred_fallthru
      _
    // Predicated region
    $region18: #{tpu_custom_call.1} parent=1 // pred_check
      _
    $region19: #{tpu_custom_call.1} parent=1 // pred_check_branch
      %60 = sbr.rel (0) target = $region21
    $region20: #{tpu_custom_call.1} parent=1 // pred_region
      %61 = dma.done [#allocation5], 4096
    $region21: #{tpu_custom_call.1} parent=1 // pred_fallthru
      _
    // Predicated region
    $region22: #{tpu_custom_call.1} parent=1 // pred_check
      _
    $region23: #{tpu_custom_call.1} parent=1 // pred_check_branch
      %63 = sbr.rel (0) target = $region25
    $region24: #{tpu_custom_call.1} parent=1 // pred_region
      %64 = dma.done [#allocation8], 8192
    $region25: #{tpu_custom_call.1} parent=1 // pred_fallthru
      _
    // Predicated region
    $region26: #{tpu_custom_call.1} parent=1 // pred_check
      _
    $region27: #{tpu_custom_call.1} parent=1 // pred_check_branch
      %66 = sbr.rel (0) target = $region29
    $region28: #{tpu_custom_call.1} parent=1 // pred_region
      %67 = dma.done [#allocation8], 16384
    $region29: #{tpu_custom_call.1} parent=1 // pred_fallthru
      _
    // Predicated region
    $region30: #{tpu_custom_call.1} parent=1 // pred_check
      _
    $region31: #{tpu_custom_call.1} parent=1 // pred_check_branch
      %69 = sbr.rel (0) target = $region33
    $region32: #{tpu_custom_call.1} parent=1 // pred_region
      %70 = dma.done [#allocation11], 64
    $region33: #{tpu_custom_call.1} parent=1 // pred_fallthru
      _
    %71 = vst [vmem:[#allocation2] sm:$0xff] 0.0
    %72 = vst [vmem:[#allocation2 + $0x8] sm:$0xff] 0.0
    %73 = vst [vmem:[#allocation3] sm:$0xff] 0.0
    %74 = vst [vmem:[#allocation3 + $0x8] sm:$0xff] 0.0
    %v75 = vld [vmem:[#allocation7] sm:$0xff]
    %v76 = vld [vmem:[#allocation7 + $0x8] sm:$0xff]
    %v77 = vld [vmem:[#allocation7 + $0x10] sm:$0xff]
    %v78 = vld [vmem:[#allocation7 + $0x18] sm:$0xff]
    %v79 = vld [vmem:[#allocation7 + $0x20] sm:$0xff]
    %v80 = vld [vmem:[#allocation7 + $0x28] sm:$0xff]
    %v81 = vld [vmem:[#allocation7 + $0x30] sm:$0xff]
    %v82 = vld [vmem:[#allocation7 + $0x38] sm:$0xff]
    %v83 = vld [vmem:[#allocation7 + $0x40] sm:$0xff]
    %v84 = vld [vmem:[#allocation7 + $0x48] sm:$0xff]
    %v85 = vld [vmem:[#allocation7 + $0x50] sm:$0xff]
    %v86 = vld [vmem:[#allocation7 + $0x58] sm:$0xff]
    %v87 = vld [vmem:[#allocation7 + $0x60] sm:$0xff]
    %v88 = vld [vmem:[#allocation7 + $0x68] sm:$0xff]
    %v89 = vld [vmem:[#allocation7 + $0x70] sm:$0xff]
    %v90 = vld [vmem:[#allocation7 + $0x78] sm:$0xff]
    %v91 = vld [vmem:[#allocation7 + $0x80] sm:$0xff]
    %v92 = vld [vmem:[#allocation7 + $0x88] sm:$0xff]
    %v93 = vld [vmem:[#allocation7 + $0x90] sm:$0xff]
    %v94 = vld [vmem:[#allocation7 + $0x98] sm:$0xff]
    %v95 = vld [vmem:[#allocation7 + $0xa0] sm:$0xff]
    %v96 = vld [vmem:[#allocation7 + $0xa8] sm:$0xff]
    %v97 = vld [vmem:[#allocation7 + $0xb0] sm:$0xff]
    %v98 = vld [vmem:[#allocation7 + $0xb8] sm:$0xff]
    %v99 = vld [vmem:[#allocation7 + $0xc0] sm:$0xff]
    %v100 = vld [vmem:[#allocation7 + $0xc8] sm:$0xff]
    %v101 = vld [vmem:[#allocation7 + $0xd0] sm:$0xff]
    %v102 = vld [vmem:[#allocation7 + $0xd8] sm:$0xff]
    %v103 = vld [vmem:[#allocation7 + $0xe0] sm:$0xff]
    %v104 = vld [vmem:[#allocation7 + $0xe8] sm:$0xff]
    %v105 = vld [vmem:[#allocation7 + $0xf0] sm:$0xff]
    %v106 = vld [vmem:[#allocation7 + $0xf8] sm:$0xff]
    %v107 = vld [vmem:[#allocation7 + $0x100] sm:$0xff]
    %v108 = vld [vmem:[#allocation7 + $0x108] sm:$0xff]
    %v109 = vld [vmem:[#allocation7 + $0x110] sm:$0xff]
    %v110 = vld [vmem:[#allocation7 + $0x118] sm:$0xff]
    %v111 = vld [vmem:[#allocation7 + $0x120] sm:$0xff]
    %v112 = vld [vmem:[#allocation7 + $0x128] sm:$0xff]
    %v113 = vld [vmem:[#allocation7 + $0x130] sm:$0xff]
    %v114 = vld [vmem:[#allocation7 + $0x138] sm:$0xff]
    %v115 = vld [vmem:[#allocation7 + $0x140] sm:$0xff]
    %v116 = vld [vmem:[#allocation7 + $0x148] sm:$0xff]
    %v117 = vld [vmem:[#allocation7 + $0x150] sm:$0xff]
    %v118 = vld [vmem:[#allocation7 + $0x158] sm:$0xff]
    %v119 = vld [vmem:[#allocation7 + $0x160] sm:$0xff]
    %v120 = vld [vmem:[#allocation7 + $0x168] sm:$0xff]
    %v121 = vld [vmem:[#allocation7 + $0x170] sm:$0xff]
    %v122 = vld [vmem:[#allocation7 + $0x178] sm:$0xff]
    %v123 = vld [vmem:[#allocation7 + $0x180] sm:$0xff]
    %v124 = vld [vmem:[#allocation7 + $0x188] sm:$0xff]
    %v125 = vld [vmem:[#allocation7 + $0x190] sm:$0xff]
    %v126 = vld [vmem:[#allocation7 + $0x198] sm:$0xff]
    %v127 = vld [vmem:[#allocation7 + $0x1a0] sm:$0xff]
    %v128 = vld [vmem:[#allocation7 + $0x1a8] sm:$0xff]
    %v129 = vld [vmem:[#allocation7 + $0x1b0] sm:$0xff]
    %v130 = vld [vmem:[#allocation7 + $0x1b8] sm:$0xff]
    %v131 = vld [vmem:[#allocation7 + $0x1c0] sm:$0xff]
    %v132 = vld [vmem:[#allocation7 + $0x1c8] sm:$0xff]
    %v133 = vld [vmem:[#allocation7 + $0x1d0] sm:$0xff]
    %v134 = vld [vmem:[#allocation7 + $0x1d8] sm:$0xff]
    %v135 = vld [vmem:[#allocation7 + $0x1e0] sm:$0xff]
    %v136 = vld [vmem:[#allocation7 + $0x1e8] sm:$0xff]
    %v137 = vld [vmem:[#allocation7 + $0x1f0] sm:$0xff]
    %v138 = vld [vmem:[#allocation7 + $0x1f8] sm:$0xff]
    %v139 = vld [vmem:[#allocation9] sm:$0xff]
    %v140 = vld [vmem:[#allocation9 + $0x8] sm:$0xff]
    %v141 = vld [vmem:[#allocation9 + $0x10] sm:$0xff]
    %v142 = vld [vmem:[#allocation9 + $0x18] sm:$0xff]
    %v143 = vld [vmem:[#allocation9 + $0x20] sm:$0xff]
    %v144 = vld [vmem:[#allocation9 + $0x28] sm:$0xff]
    %v145 = vld [vmem:[#allocation9 + $0x30] sm:$0xff]
    %v146 = vld [vmem:[#allocation9 + $0x38] sm:$0xff]
    %v147 = vld [vmem:[#allocation9 + $0x40] sm:$0xff]
    %v148 = vld [vmem:[#allocation9 + $0x48] sm:$0xff]
    %v149 = vld [vmem:[#allocation9 + $0x50] sm:$0xff]
    %v150 = vld [vmem:[#allocation9 + $0x58] sm:$0xff]
    %v151 = vld [vmem:[#allocation9 + $0x60] sm:$0xff]
    %v152 = vld [vmem:[#allocation9 + $0x68] sm:$0xff]
    %v153 = vld [vmem:[#allocation9 + $0x70] sm:$0xff]
    %v154 = vld [vmem:[#allocation9 + $0x78] sm:$0xff]
    %v155 = vld [vmem:[#allocation9 + $0x80] sm:$0xff]
    %v156 = vld [vmem:[#allocation9 + $0x88] sm:$0xff]
    %v157 = vld [vmem:[#allocation9 + $0x90] sm:$0xff]
    %v158 = vld [vmem:[#allocation9 + $0x98] sm:$0xff]
    %v159 = vld [vmem:[#allocation9 + $0xa0] sm:$0xff]
    %v160 = vld [vmem:[#allocation9 + $0xa8] sm:$0xff]
    %v161 = vld [vmem:[#allocation9 + $0xb0] sm:$0xff]
    %v162 = vld [vmem:[#allocation9 + $0xb8] sm:$0xff]
    %v163 = vld [vmem:[#allocation9 + $0xc0] sm:$0xff]
    %v164 = vld [vmem:[#allocation9 + $0xc8] sm:$0xff]
    %v165 = vld [vmem:[#allocation9 + $0xd0] sm:$0xff]
    %v166 = vld [vmem:[#allocation9 + $0xd8] sm:$0xff]
    %v167 = vld [vmem:[#allocation9 + $0xe0] sm:$0xff]
    %v168 = vld [vmem:[#allocation9 + $0xe8] sm:$0xff]
    %v169 = vld [vmem:[#allocation9 + $0xf0] sm:$0xff]
    %v170 = vld [vmem:[#allocation9 + $0xf8] sm:$0xff]
    %v171 = vld [vmem:[#allocation9 + $0x100] sm:$0xff]
    %v172 = vld [vmem:[#allocation9 + $0x108] sm:$0xff]
    %v173 = vld [vmem:[#allocation9 + $0x110] sm:$0xff]
    %v174 = vld [vmem:[#allocation9 + $0x118] sm:$0xff]
    %v175 = vld [vmem:[#allocation9 + $0x120] sm:$0xff]
    %v176 = vld [vmem:[#allocation9 + $0x128] sm:$0xff]
    %v177 = vld [vmem:[#allocation9 + $0x130] sm:$0xff]
    %v178 = vld [vmem:[#allocation9 + $0x138] sm:$0xff]
    %v179 = vld [vmem:[#allocation9 + $0x140] sm:$0xff]
    %v180 = vld [vmem:[#allocation9 + $0x148] sm:$0xff]
    %v181 = vld [vmem:[#allocation9 + $0x150] sm:$0xff]
    %v182 = vld [vmem:[#allocation9 + $0x158] sm:$0xff]
    %v183 = vld [vmem:[#allocation9 + $0x160] sm:$0xff]
    %v184 = vld [vmem:[#allocation9 + $0x168] sm:$0xff]
    %v185 = vld [vmem:[#allocation9 + $0x170] sm:$0xff]
    %v186 = vld [vmem:[#allocation9 + $0x178] sm:$0xff]
    %v187 = vld [vmem:[#allocation9 + $0x180] sm:$0xff]
    %v188 = vld [vmem:[#allocation9 + $0x188] sm:$0xff]
    %v189 = vld [vmem:[#allocation9 + $0x190] sm:$0xff]
    %v190 = vld [vmem:[#allocation9 + $0x198] sm:$0xff]
    %v191 = vld [vmem:[#allocation9 + $0x1a0] sm:$0xff]
    %v192 = vld [vmem:[#allocation9 + $0x1a8] sm:$0xff]
    %v193 = vld [vmem:[#allocation9 + $0x1b0] sm:$0xff]
    %v194 = vld [vmem:[#allocation9 + $0x1b8] sm:$0xff]
    %v195 = vld [vmem:[#allocation9 + $0x1c0] sm:$0xff]
    %v196 = vld [vmem:[#allocation9 + $0x1c8] sm:$0xff]
    %v197 = vld [vmem:[#allocation9 + $0x1d0] sm:$0xff]
    %v198 = vld [vmem:[#allocation9 + $0x1d8] sm:$0xff]
    %v199 = vld [vmem:[#allocation9 + $0x1e0] sm:$0xff]
    %v200 = vld [vmem:[#allocation9 + $0x1e8] sm:$0xff]
    %v201 = vld [vmem:[#allocation9 + $0x1f0] sm:$0xff]
    %v202 = vld [vmem:[#allocation9 + $0x1f8] sm:$0xff]
    %v203 = vld [vmem:[#allocation9 + $0x200] sm:$0xff]
    %v204 = vld [vmem:[#allocation9 + $0x208] sm:$0xff]
    %v205 = vld [vmem:[#allocation9 + $0x210] sm:$0xff]
    %v206 = vld [vmem:[#allocation9 + $0x218] sm:$0xff]
    %v207 = vld [vmem:[#allocation9 + $0x220] sm:$0xff]
    %v208 = vld [vmem:[#allocation9 + $0x228] sm:$0xff]
    %v209 = vld [vmem:[#allocation9 + $0x230] sm:$0xff]
    %v210 = vld [vmem:[#allocation9 + $0x238] sm:$0xff]
    %v211 = vld [vmem:[#allocation9 + $0x240] sm:$0xff]
    %v212 = vld [vmem:[#allocation9 + $0x248] sm:$0xff]
    %v213 = vld [vmem:[#allocation9 + $0x250] sm:$0xff]
    %v214 = vld [vmem:[#allocation9 + $0x258] sm:$0xff]
    %v215 = vld [vmem:[#allocation9 + $0x260] sm:$0xff]
    %v216 = vld [vmem:[#allocation9 + $0x268] sm:$0xff]
    %v217 = vld [vmem:[#allocation9 + $0x270] sm:$0xff]
    %v218 = vld [vmem:[#allocation9 + $0x278] sm:$0xff]
    %v219 = vld [vmem:[#allocation9 + $0x280] sm:$0xff]
    %v220 = vld [vmem:[#allocation9 + $0x288] sm:$0xff]
    %v221 = vld [vmem:[#allocation9 + $0x290] sm:$0xff]
    %v222 = vld [vmem:[#allocation9 + $0x298] sm:$0xff]
    %v223 = vld [vmem:[#allocation9 + $0x2a0] sm:$0xff]
    %v224 = vld [vmem:[#allocation9 + $0x2a8] sm:$0xff]
    %v225 = vld [vmem:[#allocation9 + $0x2b0] sm:$0xff]
    %v226 = vld [vmem:[#allocation9 + $0x2b8] sm:$0xff]
    %v227 = vld [vmem:[#allocation9 + $0x2c0] sm:$0xff]
    %v228 = vld [vmem:[#allocation9 + $0x2c8] sm:$0xff]
    %v229 = vld [vmem:[#allocation9 + $0x2d0] sm:$0xff]
    %v230 = vld [vmem:[#allocation9 + $0x2d8] sm:$0xff]
    %v231 = vld [vmem:[#allocation9 + $0x2e0] sm:$0xff]
    %v232 = vld [vmem:[#allocation9 + $0x2e8] sm:$0xff]
    %v233 = vld [vmem:[#allocation9 + $0x2f0] sm:$0xff]
    %v234 = vld [vmem:[#allocation9 + $0x2f8] sm:$0xff]
    %v235 = vld [vmem:[#allocation9 + $0x300] sm:$0xff]
    %v236 = vld [vmem:[#allocation9 + $0x308] sm:$0xff]
    %v237 = vld [vmem:[#allocation9 + $0x310] sm:$0xff]
    %v238 = vld [vmem:[#allocation9 + $0x318] sm:$0xff]
    %v239 = vld [vmem:[#allocation9 + $0x320] sm:$0xff]
    %v240 = vld [vmem:[#allocation9 + $0x328] sm:$0xff]
    %v241 = vld [vmem:[#allocation9 + $0x330] sm:$0xff]
    %v242 = vld [vmem:[#allocation9 + $0x338] sm:$0xff]
    %v243 = vld [vmem:[#allocation9 + $0x340] sm:$0xff]
    %v244 = vld [vmem:[#allocation9 + $0x348] sm:$0xff]
    %v245 = vld [vmem:[#allocation9 + $0x350] sm:$0xff]
    %v246 = vld [vmem:[#allocation9 + $0x358] sm:$0xff]
    %v247 = vld [vmem:[#allocation9 + $0x360] sm:$0xff]
    %v248 = vld [vmem:[#allocation9 + $0x368] sm:$0xff]
    %v249 = vld [vmem:[#allocation9 + $0x370] sm:$0xff]
    %v250 = vld [vmem:[#allocation9 + $0x378] sm:$0xff]
    %v251 = vld [vmem:[#allocation9 + $0x380] sm:$0xff]
    %v252 = vld [vmem:[#allocation9 + $0x388] sm:$0xff]
    %v253 = vld [vmem:[#allocation9 + $0x390] sm:$0xff]
    %v254 = vld [vmem:[#allocation9 + $0x398] sm:$0xff]
    %v255 = vld [vmem:[#allocation9 + $0x3a0] sm:$0xff]
    %v256 = vld [vmem:[#allocation9 + $0x3a8] sm:$0xff]
    %v257 = vld [vmem:[#allocation9 + $0x3b0] sm:$0xff]
    %v258 = vld [vmem:[#allocation9 + $0x3b8] sm:$0xff]
    %v259 = vld [vmem:[#allocation9 + $0x3c0] sm:$0xff]
    %v260 = vld [vmem:[#allocation9 + $0x3c8] sm:$0xff]
    %v261 = vld [vmem:[#allocation9 + $0x3d0] sm:$0xff]
    %v262 = vld [vmem:[#allocation9 + $0x3d8] sm:$0xff]
    %v263 = vld [vmem:[#allocation9 + $0x3e0] sm:$0xff]
    %v264 = vld [vmem:[#allocation9 + $0x3e8] sm:$0xff]
    %v265 = vld [vmem:[#allocation9 + $0x3f0] sm:$0xff]
    %v266 = vld [vmem:[#allocation9 + $0x3f8] sm:$0xff]
    %v267 = vld [vmem:[#allocation10] sm:$0xf]
    loop: start=0, step=1, limit=8
    $region34: #{tpu_custom_call.1} parent=1 // loop_pre_header
      _
    $region35: #{tpu_custom_call.1} parent=1 // loop_header
      %s269 = sphi 0, %s273
      %p270 = scmp.ge.s32.totalorder %s269, 8
    $region36: #{tpu_custom_call.1} parent=1 // loop_header_branch
      %272 = sbr.rel (%p270) target = $region40
    $region37: #{tpu_custom_call.1} parent=1 // loop_body
      %s274 = smul.u32 %s269, 4
      %s275 = smul.addr %s274, 8
      %s276 = scalar_lea.vmem [#allocation4], %s275
      %v277 = vld [vmem:[%s276] sm:$0xff]
      %v278 = vld [vmem:[%s276 + $0x8] sm:$0xff]
      %v279 = vld [vmem:[%s276 + $0x10] sm:$0xff]
      %v280 = vld [vmem:[%s276 + $0x18] sm:$0xff]
      %v281 = vld [vmem:[#allocation2] sm:$0xff]
      %282 = vmatprep.subr.mxu0 %v76
      %283 = vmatpush1.msra.mxu0 %v75
      %284 = vmatprep.subr.mxu0 %v80
      %285 = vmatpush1.msra.mxu0 %v79
      %286 = vmatprep.subr.mxu0 %v84
      %287 = vmatpush1.msra.mxu0 %v83
      %288 = vmatprep.subr.mxu0 %v88
      %289 = vmatpush1.msra.mxu0 %v87
      %290 = vmatprep.subr.mxu0 %v92
      %291 = vmatpush1.msra.mxu0 %v91
      %292 = vmatprep.subr.mxu0 %v96
      %293 = vmatpush1.msra.mxu0 %v95
      %294 = vmatprep.subr.mxu0 %v100
      %295 = vmatpush1.msra.mxu0 %v99
      %296 = vmatprep.subr.mxu0 %v104
      %297 = vmatpush1.msra.mxu0 %v103
      %298 = vmatprep.subr.mxu0 %v108
      %299 = vmatpush1.msra.mxu0 %v107
      %300 = vmatprep.subr.mxu0 %v112
      %301 = vmatpush1.msra.mxu0 %v111
      %302 = vmatprep.subr.mxu0 %v116
      %303 = vmatpush1.msra.mxu0 %v115
      %304 = vmatprep.subr.mxu0 %v120
      %305 = vmatpush1.msra.mxu0 %v119
      %306 = vmatprep.subr.mxu0 %v124
      %307 = vmatpush1.msra.mxu0 %v123
      %308 = vmatprep.subr.mxu0 %v128
      %309 = vmatpush1.msra.mxu0 %v127
      %310 = vmatprep.subr.mxu0 %v132
      %311 = vmatpush1.msra.mxu0 %v131
      %312 = vmatprep.subr.mxu0 %v136
      %313 = vmatpush1.msra.mxu0 %v135
      %314 = vmatprep.subr.mxu0 0.0
      %315 = vmatpush1.msra.mxu0 0.0
      %316 = vmatprep.subr.mxu0 0.0
      %317 = vmatpush1.msra.mxu0 0.0
      %318 = vmatprep.subr.mxu0 0.0
      %319 = vmatpush1.msra.mxu0 0.0
      %320 = vmatprep.subr.mxu0 0.0
      %321 = vmatpush1.msra.mxu0 0.0
      %322 = vmatprep.subr.mxu0 0.0
      %323 = vmatpush1.msra.mxu0 0.0
      %324 = vmatprep.subr.mxu0 0.0
      %325 = vmatpush1.msra.mxu0 0.0
      %326 = vmatprep.subr.mxu0 0.0
      %327 = vmatpush1.msra.mxu0 0.0
      %328 = vmatprep.subr.mxu0 0.0
      %329 = vmatpush1.msra.mxu0 0.0
      %330 = vmatprep.subr.mxu0 0.0
      %331 = vmatpush1.msra.mxu0 0.0
      %332 = vmatprep.subr.mxu0 0.0
      %333 = vmatpush1.msra.mxu0 0.0
      %334 = vmatprep.subr.mxu0 0.0
      %335 = vmatpush1.msra.mxu0 0.0
      %336 = vmatprep.subr.mxu0 0.0
      %337 = vmatpush1.msra.mxu0 0.0
      %338 = vmatprep.subr.mxu0 0.0
      %339 = vmatpush1.msra.mxu0 0.0
      %340 = vmatprep.subr.mxu0 0.0
      %341 = vmatpush1.msra.mxu0 0.0
      %342 = vmatprep.subr.mxu0 0.0
      %343 = vmatpush1.msra.mxu0 0.0
      %344 = vmatprep.subr.mxu0 0.0
      %345 = vmatpush1.msra.mxu0 0.0
      %346 = vmatprep.mubr.f32.mxu0 0.0
      %347 = vmatmul.mubr.f32.gmra.mrb[0].mxu0 %v281
      %v348 = vpop.f32.mrb[0].mxu0
      %v349 = vadd.f32 0.0, %v348
      %v350 = vpop.f32.mrb[0].mxu0
      %v351 = vadd.f32 0.0, %v350
      %352 = vdwg.mxu0
      %353 = vmatprep.subr.mxu0 %v78
      %354 = vmatpush1.msra.mxu0 %v77
      %355 = vmatprep.subr.mxu0 %v82
      %356 = vmatpush1.msra.mxu0 %v81
      %357 = vmatprep.subr.mxu0 %v86
      %358 = vmatpush1.msra.mxu0 %v85
      %359 = vmatprep.subr.mxu0 %v90
      %360 = vmatpush1.msra.mxu0 %v89
      %361 = vmatprep.subr.mxu0 %v94
      %362 = vmatpush1.msra.mxu0 %v93
      %363 = vmatprep.subr.mxu0 %v98
      %364 = vmatpush1.msra.mxu0 %v97
      %365 = vmatprep.subr.mxu0 %v102
      %366 = vmatpush1.msra.mxu0 %v101
      %367 = vmatprep.subr.mxu0 %v106
      %368 = vmatpush1.msra.mxu0 %v105
      %369 = vmatprep.subr.mxu0 %v110
      %370 = vmatpush1.msra.mxu0 %v109
      %371 = vmatprep.subr.mxu0 %v114
      %372 = vmatpush1.msra.mxu0 %v113
      %373 = vmatprep.subr.mxu0 %v118
      %374 = vmatpush1.msra.mxu0 %v117
      %375 = vmatprep.subr.mxu0 %v122
      %376 = vmatpush1.msra.mxu0 %v121
      %377 = vmatprep.subr.mxu0 %v126
      %378 = vmatpush1.msra.mxu0 %v125
      %379 = vmatprep.subr.mxu0 %v130
      %380 = vmatpush1.msra.mxu0 %v129
      %381 = vmatprep.subr.mxu0 %v134
      %382 = vmatpush1.msra.mxu0 %v133
      %383 = vmatprep.subr.mxu0 %v138
      %384 = vmatpush1.msra.mxu0 %v137
      %385 = vmatprep.subr.mxu0 0.0
      %386 = vmatpush1.msra.mxu0 0.0
      %387 = vmatprep.subr.mxu0 0.0
      %388 = vmatpush1.msra.mxu0 0.0
      %389 = vmatprep.subr.mxu0 0.0
      %390 = vmatpush1.msra.mxu0 0.0
      %391 = vmatprep.subr.mxu0 0.0
      %392 = vmatpush1.msra.mxu0 0.0
      %393 = vmatprep.subr.mxu0 0.0
      %394 = vmatpush1.msra.mxu0 0.0
      %395 = vmatprep.subr.mxu0 0.0
      %396 = vmatpush1.msra.mxu0 0.0
      %397 = vmatprep.subr.mxu0 0.0
      %398 = vmatpush1.msra.mxu0 0.0
      %399 = vmatprep.subr.mxu0 0.0
      %400 = vmatpush1.msra.mxu0 0.0
      %401 = vmatprep.subr.mxu0 0.0
      %402 = vmatpush1.msra.mxu0 0.0
      %403 = vmatprep.subr.mxu0 0.0
      %404 = vmatpush1.msra.mxu0 0.0
      %405 = vmatprep.subr.mxu0 0.0
      %406 = vmatpush1.msra.mxu0 0.0
      %407 = vmatprep.subr.mxu0 0.0
      %408 = vmatpush1.msra.mxu0 0.0
      %409 = vmatprep.subr.mxu0 0.0
      %410 = vmatpush1.msra.mxu0 0.0
      %411 = vmatprep.subr.mxu0 0.0
      %412 = vmatpush1.msra.mxu0 0.0
      %413 = vmatprep.subr.mxu0 0.0
      %414 = vmatpush1.msra.mxu0 0.0
      %415 = vmatprep.subr.mxu0 0.0
      %416 = vmatpush1.msra.mxu0 0.0
      %417 = vmatprep.mubr.f32.mxu0 0.0
      %418 = vmatmul.mubr.f32.gmra.mrb[0].mxu0 %v281
      %v419 = vpop.f32.mrb[0].mxu0
      %v420 = vadd.f32 0.0, %v419
      %v421 = vpop.f32.mrb[0].mxu0
      %v422 = vadd.f32 0.0, %v421
      %423 = vdwg.mxu0
      %v424 = vadd.f32 %v277, %v349
      %v425 = vadd.f32 %v278, %v351
      %v426 = vadd.f32 %v279, %v420
      %v427 = vadd.f32 %v280, %v422
      %v428 = vxor.u32 %v424, 2147483648
      %v429 = vmul.f32 %v428, 1.442695
      %v430 = vpow.pop %v429
      %v431 = vadd.f32 %v430, 1.0
      %v432 = vrcp.pop %v431
      %v433 = vmul.f32 1.0, %v432
      %v434 = vxor.u32 %v425, 2147483648
      %v435 = vmul.f32 %v434, 1.442695
      %v436 = vpow.pop %v435
      %v437 = vadd.f32 %v436, 1.0
      %v438 = vrcp.pop %v437
      %v439 = vmul.f32 1.0, %v438
      %v440 = vtanh.pop %v426
      %v441 = vxor.u32 %v427, 2147483648
      %v442 = vmul.f32 %v441, 1.442695
      %v443 = vpow.pop %v442
      %v444 = vadd.f32 %v443, 1.0
      %v445 = vrcp.pop %v444
      %v446 = vmul.f32 1.0, %v445
      %v447 = vld [vmem:[#allocation3] sm:$0xff]
      %v448 = vmul.f32 %v439, %v447
      %v449 = vmul.f32 %v433, %v440
      %v450 = vadd.f32 %v448, %v449
      %v451 = vtanh.pop %v450
      %v452 = vmul.f32 %v446, %v451
      %453 = vst [vmem:[#allocation2] sm:$0xff] %v452
      %454 = vst [vmem:[#allocation3] sm:$0xff] %v450
      %s455 = scalar_lea.vmem [#allocation2], 8
      %v456 = vld [vmem:[%s455] sm:$0xff]
      %v458 = vlaneseq
      %v459 = vshrl.u32 %v458, 7
      %v460 = vsub.s32 0, %v459
      %v461 = vrot.slane %v267, %v460
      %v462 = vlaneseq
      %v463 = vshrl.u32 %v462, 7
      %v464 = vsub.s32 1, %v463
      %v465 = vrot.slane %v267, %v464
      %v466 = vlaneseq
      %v467 = vshrl.u32 %v466, 7
      %v468 = vsub.s32 2, %v467
      %v469 = vrot.slane %v267, %v468
      %v470 = vlaneseq
      %v471 = vshrl.u32 %v470, 7
      %v472 = vsub.s32 3, %v471
      %v473 = vrot.slane %v267, %v472
      %478 = vmatprep.subr.mxu0 %v140
      %479 = vmatpush1.msra.mxu0 %v139
      %480 = vmatprep.subr.mxu0 %v144
      %481 = vmatpush1.msra.mxu0 %v143
      %482 = vmatprep.subr.mxu0 %v148
      %483 = vmatpush1.msra.mxu0 %v147
      %484 = vmatprep.subr.mxu0 %v152
      %485 = vmatpush1.msra.mxu0 %v151
      %486 = vmatprep.subr.mxu0 %v156
      %487 = vmatpush1.msra.mxu0 %v155
      %488 = vmatprep.subr.mxu0 %v160
      %489 = vmatpush1.msra.mxu0 %v159
      %490 = vmatprep.subr.mxu0 %v164
      %491 = vmatpush1.msra.mxu0 %v163
      %492 = vmatprep.subr.mxu0 %v168
      %493 = vmatpush1.msra.mxu0 %v167
      %494 = vmatprep.subr.mxu0 %v172
      %495 = vmatpush1.msra.mxu0 %v171
      %496 = vmatprep.subr.mxu0 %v176
      %497 = vmatpush1.msra.mxu0 %v175
      %498 = vmatprep.subr.mxu0 %v180
      %499 = vmatpush1.msra.mxu0 %v179
      %500 = vmatprep.subr.mxu0 %v184
      %501 = vmatpush1.msra.mxu0 %v183
      %502 = vmatprep.subr.mxu0 %v188
      %503 = vmatpush1.msra.mxu0 %v187
      %504 = vmatprep.subr.mxu0 %v192
      %505 = vmatpush1.msra.mxu0 %v191
      %506 = vmatprep.subr.mxu0 %v196
      %507 = vmatpush1.msra.mxu0 %v195
      %508 = vmatprep.subr.mxu0 %v200
      %509 = vmatpush1.msra.mxu0 %v199
      %510 = vmatprep.subr.mxu0 %v204
      %511 = vmatpush1.msra.mxu0 %v203
      %512 = vmatprep.subr.mxu0 %v208
      %513 = vmatpush1.msra.mxu0 %v207
      %514 = vmatprep.subr.mxu0 %v212
      %515 = vmatpush1.msra.mxu0 %v211
      %516 = vmatprep.subr.mxu0 %v216
      %517 = vmatpush1.msra.mxu0 %v215
      %518 = vmatprep.subr.mxu0 %v220
      %519 = vmatpush1.msra.mxu0 %v219
      %520 = vmatprep.subr.mxu0 %v224
      %521 = vmatpush1.msra.mxu0 %v223
      %522 = vmatprep.subr.mxu0 %v228
      %523 = vmatpush1.msra.mxu0 %v227
      %524 = vmatprep.subr.mxu0 %v232
      %525 = vmatpush1.msra.mxu0 %v231
      %526 = vmatprep.subr.mxu0 %v236
      %527 = vmatpush1.msra.mxu0 %v235
      %528 = vmatprep.subr.mxu0 %v240
      %529 = vmatpush1.msra.mxu0 %v239
      %530 = vmatprep.subr.mxu0 %v244
      %531 = vmatpush1.msra.mxu0 %v243
      %532 = vmatprep.subr.mxu0 %v248
      %533 = vmatpush1.msra.mxu0 %v247
      %534 = vmatprep.subr.mxu0 %v252
      %535 = vmatpush1.msra.mxu0 %v251
      %536 = vmatprep.subr.mxu0 %v256
      %537 = vmatpush1.msra.mxu0 %v255
      %538 = vmatprep.subr.mxu0 %v260
      %539 = vmatpush1.msra.mxu0 %v259
      %540 = vmatprep.subr.mxu0 %v264
      %541 = vmatpush1.msra.mxu0 %v263
      %542 = vmatprep.mubr.f32.mxu0 %v456
      %543 = vmatmul.mubr.f32.gmra.mrb[0].mxu0 %v452
      %v544 = vpop.f32.mrb[0].mxu0
      %v545 = vadd.f32 %v461, %v544
      %v546 = vpop.f32.mrb[0].mxu0
      %v547 = vadd.f32 %v465, %v546
      %548 = vdwg.mxu0
      %549 = vmatprep.subr.mxu0 %v142
      %550 = vmatpush1.msra.mxu0 %v141
      %551 = vmatprep.subr.mxu0 %v146
      %552 = vmatpush1.msra.mxu0 %v145
      %553 = vmatprep.subr.mxu0 %v150
      %554 = vmatpush1.msra.mxu0 %v149
      %555 = vmatprep.subr.mxu0 %v154
      %556 = vmatpush1.msra.mxu0 %v153
      %557 = vmatprep.subr.mxu0 %v158
      %558 = vmatpush1.msra.mxu0 %v157
      %559 = vmatprep.subr.mxu0 %v162
      %560 = vmatpush1.msra.mxu0 %v161
      %561 = vmatprep.subr.mxu0 %v166
      %562 = vmatpush1.msra.mxu0 %v165
      %563 = vmatprep.subr.mxu0 %v170
      %564 = vmatpush1.msra.mxu0 %v169
      %565 = vmatprep.subr.mxu0 %v174
      %566 = vmatpush1.msra.mxu0 %v173
      %567 = vmatprep.subr.mxu0 %v178
      %568 = vmatpush1.msra.mxu0 %v177
      %569 = vmatprep.subr.mxu0 %v182
      %570 = vmatpush1.msra.mxu0 %v181
      %571 = vmatprep.subr.mxu0 %v186
      %572 = vmatpush1.msra.mxu0 %v185
      %573 = vmatprep.subr.mxu0 %v190
      %574 = vmatpush1.msra.mxu0 %v189
      %575 = vmatprep.subr.mxu0 %v194
      %576 = vmatpush1.msra.mxu0 %v193
      %577 = vmatprep.subr.mxu0 %v198
      %578 = vmatpush1.msra.mxu0 %v197
      %579 = vmatprep.subr.mxu0 %v202
      %580 = vmatpush1.msra.mxu0 %v201
      %581 = vmatprep.subr.mxu0 %v206
      %582 = vmatpush1.msra.mxu0 %v205
      %583 = vmatprep.subr.mxu0 %v210
      %584 = vmatpush1.msra.mxu0 %v209
      %585 = vmatprep.subr.mxu0 %v214
      %586 = vmatpush1.msra.mxu0 %v213
      %587 = vmatprep.subr.mxu0 %v218
      %588 = vmatpush1.msra.mxu0 %v217
      %589 = vmatprep.subr.mxu0 %v222
      %590 = vmatpush1.msra.mxu0 %v221
      %591 = vmatprep.subr.mxu0 %v226
      %592 = vmatpush1.msra.mxu0 %v225
      %593 = vmatprep.subr.mxu0 %v230
      %594 = vmatpush1.msra.mxu0 %v229
      %595 = vmatprep.subr.mxu0 %v234
      %596 = vmatpush1.msra.mxu0 %v233
      %597 = vmatprep.subr.mxu0 %v238
      %598 = vmatpush1.msra.mxu0 %v237
      %599 = vmatprep.subr.mxu0 %v242
      %600 = vmatpush1.msra.mxu0 %v241
      %601 = vmatprep.subr.mxu0 %v246
      %602 = vmatpush1.msra.mxu0 %v245
      %603 = vmatprep.subr.mxu0 %v250
      %604 = vmatpush1.msra.mxu0 %v249
      %605 = vmatprep.subr.mxu0 %v254
      %606 = vmatpush1.msra.mxu0 %v253
      %607 = vmatprep.subr.mxu0 %v258
      %608 = vmatpush1.msra.mxu0 %v257
      %609 = vmatprep.subr.mxu0 %v262
      %610 = vmatpush1.msra.mxu0 %v261
      %611 = vmatprep.subr.mxu0 %v266
      %612 = vmatpush1.msra.mxu0 %v265
      %613 = vmatprep.mubr.f32.mxu0 %v456
      %614 = vmatmul.mubr.f32.gmra.mrb[0].mxu0 %v452
      %v615 = vpop.f32.mrb[0].mxu0
      %v616 = vadd.f32 %v469, %v615
      %v617 = vpop.f32.mrb[0].mxu0
      %v618 = vadd.f32 %v473, %v617
      %619 = vdwg.mxu0
      %v620 = vxor.u32 %v545, 2147483648
      %v621 = vmul.f32 %v620, 1.442695
      %v622 = vpow.pop %v621
      %v623 = vadd.f32 %v622, 1.0
      %v624 = vrcp.pop %v623
      %v625 = vmul.f32 1.0, %v624
      %v626 = vxor.u32 %v547, 2147483648
      %v627 = vmul.f32 %v626, 1.442695
      %v628 = vpow.pop %v627
      %v629 = vadd.f32 %v628, 1.0
      %v630 = vrcp.pop %v629
      %v631 = vmul.f32 1.0, %v630
      %v632 = vtanh.pop %v616
      %v633 = vxor.u32 %v618, 2147483648
      %v634 = vmul.f32 %v633, 1.442695
      %v635 = vpow.pop %v634
      %v636 = vadd.f32 %v635, 1.0
      %v637 = vrcp.pop %v636
      %v638 = vmul.f32 1.0, %v637
      %s639 = scalar_lea.vmem [#allocation3], 8
      %v640 = vld [vmem:[%s639] sm:$0xff]
      %v641 = vmul.f32 %v631, %v640
      %v642 = vmul.f32 %v625, %v632
      %v643 = vadd.f32 %v641, %v642
      %v644 = vtanh.pop %v643
      %v645 = vmul.f32 %v638, %v644
      %646 = vst [vmem:[%s455] sm:$0xff] %v645
      %647 = vst [vmem:[%s639] sm:$0xff] %v643
    $region38: #{tpu_custom_call.1} parent=1 // loop_footer
      %s273 = sadd.s32 1, %s269
    $region39: #{tpu_custom_call.1} parent=1 // loop_footer_branch
      %268 = sbr.rel target = $region35
    $region40: #{tpu_custom_call.1} parent=1 // loop_exit
      _
    %s648 = scalar_lea.vmem [#allocation2], 8
    %v649 = vld [vmem:[%s648] sm:$0xff]
    %650 = vst [vmem:[#allocation12] sm:$0xff] %v649
    // Predicated region
    $region41: #{tpu_custom_call.1} parent=1 // pred_check
      _
    $region42: #{tpu_custom_call.1} parent=1 // pred_check_branch
      %652 = sbr.rel (0) target = $region44
    $region43: #{tpu_custom_call.1} parent=1 // pred_region
      %s654 = ssub.s32 128, 128
      %655 = vsyncadd [#allocation6], %s654
      %s657 = sshll.u32 [#allocation12], 4
      %s658 = int_to_ptr.vmem [resolvable:$true] %s657
      %660 = dma.vmem_to_hbm [thread:$0]  %s658, 128, %s4, [#allocation6]
    $region44: #{tpu_custom_call.1} parent=1 // pred_fallthru
      _
    // Predicated region
    $region45: #{tpu_custom_call.1} parent=1 // pred_check
      _
    $region46: #{tpu_custom_call.1} parent=1 // pred_check_branch
      %662 = sbr.rel (0) target = $region48
    $region47: #{tpu_custom_call.1} parent=1 // pred_region
      %663 = dma.done [#allocation6], 128
    $region48: #{tpu_custom_call.1} parent=1 // pred_fallthru
      _
    %664 = vsyncpa [#allocation5], 1
    %665 = vsyncpa [#allocation8], 1
    %666 = vsyncpa [#allocation11], 1
    %667 = vsyncpa [#allocation6], 1

</llo_original>
